<compile_context>
chip_gen: v5e
topology: v5e:2x2
jax: 0.10.0
libtpu: 0.0.40
codegen_flags: <defaults>
</compile_context>

<pallas_src>
import functools

import jax
import jax.numpy as jnp
from jax.experimental import pallas as pl
from jax.experimental.pallas import tpu as pltpu

PAD = 128            # lane-dense padded width for hidden / output layers
XPAD = 8             # padded input width: input_dim + 1 (ones carrier) -> 8
COMPUTE_DTYPE = jnp.bfloat16


def _round_up(n, m):
    return ((n + m - 1) // m) * m


def _simplenet_kernel(x_ref, w1_ref, w23_ref, out_ref):
    # Layer 1: Linear (+bias folded into W1 via the ones column in x) + ReLU.
    h1 = jnp.dot(x_ref[...], w1_ref[...], preferred_element_type=jnp.float32)
    h1 = jnp.maximum(h1, 0.0).astype(COMPUTE_DTYPE)

    # Layer 2: Linear (+folded bias, ones carrier kept alive) + ReLU.
    h2 = jnp.dot(h1, w23_ref[0], preferred_element_type=jnp.float32)
    h2 = jnp.maximum(h2, 0.0).astype(COMPUTE_DTYPE)

    # Dropout(p=0.2): identity in eval/inference mode.
    # TODO(synk): training-mode dropout (pltpu.prng_seed/prng_random_bits +
    #             mask & 1/(1-p) scale) not wired up; eval() semantics only.

    # Output layer: Linear (+folded bias); lane-dense (tb, 128) unmasked store.
    out = jnp.dot(h2, w23_ref[1], preferred_element_type=jnp.float32)
    out_ref[...] = out.astype(out_ref.dtype)


def pack_params(params, input_dim, hidden_dim, output_dim):
    """Pad/fold weights ONCE (call outside the per-step forward).

    Returns:
      W1  : (8, 128)     bf16 -- row `input_dim` carries b1, plus a 1.0
            "ones carrier" at [input_dim, hidden_dim] so the bias fold
            propagates through ReLU into the next layers.
      W23 : (2, 128, 128) bf16 -- stacked W2 / W3 with the same bias-row fold
            (W2 also keeps the ones carrier alive; W3 does not need one).
    """
    w1, b1, w2, b2, w3, b3 = params
    assert input_dim + 1 <= XPAD
    assert hidden_dim + 1 <= PAD and output_dim <= PAD

    W1 = jnp.zeros((XPAD, PAD), jnp.float32)
    W1 = W1.at[:input_dim, :hidden_dim].set(w1.astype(jnp.float32))
    W1 = W1.at[input_dim, :hidden_dim].set(b1.astype(jnp.float32))
    W1 = W1.at[input_dim, hidden_dim].set(1.0)           # ones carrier

    W2 = jnp.zeros((PAD, PAD), jnp.float32)
    W2 = W2.at[:hidden_dim, :hidden_dim].set(w2.astype(jnp.float32))
    W2 = W2.at[hidden_dim, :hidden_dim].set(b2.astype(jnp.float32))
    W2 = W2.at[hidden_dim, hidden_dim].set(1.0)           # ones carrier

    W3 = jnp.zeros((PAD, PAD), jnp.float32)
    W3 = W3.at[:hidden_dim, :output_dim].set(w3.astype(jnp.float32))
    W3 = W3.at[hidden_dim, :output_dim].set(b3.astype(jnp.float32))

    return W1.astype(COMPUTE_DTYPE), jnp.stack([W2, W3]).astype(COMPUTE_DTYPE)


@functools.partial(jax.jit, static_argnames=("output_dim", "batch_tile"))
def simplenet_forward(x, w1_packed, w23_packed, *, output_dim, batch_tile=2048):
    """Fused SimpleNet forward in a single batch-tiled Pallas kernel."""
    batch, input_dim = x.shape
    assert input_dim + 1 <= XPAD

    # Batch tiling: multiple of 16 sublanes (bf16 packing), split into >=2
    # grid steps whenever the batch allows it (so the "parallel" axis can use
    # both v7x TensorCores), capped at batch_tile rows (~1 MiB f32 out buffer
    # per tile at 2048 -- trivially inside VMEM on every generation).
    tb = max(16, min(batch_tile, _round_up(pl.cdiv(batch, 2), 16)))
    batch_pad = _round_up(batch, tb)
    grid = (batch_pad // tb,)

    # Input prep: one concat (adds the ones-carrier column) + one pad.  No
    # full-width (batch, 128) zero fill / scatter; padded rows are all-zero so
    # they produce zero outputs (sliced off below).
    ones_col = jnp.ones((batch, 1), COMPUTE_DTYPE)
    zero_cols = jnp.zeros((batch, XPAD - input_dim - 1), COMPUTE_DTYPE)
    x_pad = jnp.concatenate(
        [x.astype(COMPUTE_DTYPE), ones_col, zero_cols], axis=1)
    if batch_pad > batch:
        x_pad = jnp.pad(x_pad, ((0, batch_pad - batch), (0, 0)))

    flops = 2 * batch_pad * (XPAD * PAD + 2 * PAD * PAD)
    bytes_accessed = (x_pad.size * 2 + w1_packed.size * 2
                      + w23_packed.size * 2 + batch_pad * PAD * 4)

    out_pad = pl.pallas_call(
        _simplenet_kernel,
        out_shape=jax.ShapeDtypeStruct((batch_pad, PAD), jnp.float32),
        grid=grid,
        in_specs=[
            pl.BlockSpec((tb, XPAD), lambda i: (i, 0)),        # x: batch-tiled
            pl.BlockSpec((XPAD, PAD), lambda i: (0, 0)),       # W1: resident
            pl.BlockSpec((2, PAD, PAD), lambda i: (0, 0, 0)),  # W2/W3: resident
        ],
        out_specs=pl.BlockSpec((tb, PAD), lambda i: (i, 0)),
        compiler_params=pltpu.CompilerParams(
            dimension_semantics=("parallel",),                 # megacore on v7x
        ),
        cost_estimate=pl.CostEstimate(
            flops=flops, transcendentals=0, bytes_accessed=bytes_accessed),
    )(x_pad, w1_packed, w23_packed)

    # Slice the real rows / columns back out of the lane-dense padded output.
    return out_pad[:batch, :output_dim]


def init_params(key, input_dim, hidden_dim, output_dim):
    """Deterministic init mimicking PyTorch Linear's U(-1/sqrt(fan_in), +)."""
    def linear_init(k, fan_in, fan_out):
        kw, kb = jax.random.split(k)
        bound = 1.0 / jnp.sqrt(jnp.float32(fan_in))
        # stored as (in, out) so the kernel computes x @ W
        w = jax.random.uniform(kw, (fan_in, fan_out), jnp.float32,
                               -bound, bound)
        b = jax.random.uniform(kb, (fan_out,), jnp.float32, -bound, bound)
        return w, b

    k1, k2, k3 = jax.random.split(key, 3)
    w1, b1 = linear_init(k1, input_dim, hidden_dim)
    w2, b2 = linear_init(k2, hidden_dim, hidden_dim)
    w3, b3 = linear_init(k3, hidden_dim, output_dim)
    return (w1, b1, w2, b2, w3, b3)


def reference_forward(x, params):
    """Plain-JAX f32 reference of the same forward (for sanity check)."""
    w1, b1, w2, b2, w3, b3 = params
    h = jnp.maximum(x @ w1 + b1, 0.0)
    h = jnp.maximum(h @ w2 + b2, 0.0)
    return h @ w3 + b3


if __name__ == "__main__":
    # Moon data: input_dim=2 features, hidden_dim=32, output_dim=1, batch=8.
    input_dim, hidden_dim, output_dim = 2, 32, 1
    batch = 8

    key = jax.random.PRNGKey(0)
    kx, kp = jax.random.split(key)
    x = jax.random.normal(kx, (batch, input_dim), jnp.float32)
    params = init_params(kp, input_dim, hidden_dim, output_dim)

    # Pack / fold the weights once (hoisted out of the per-call forward).
    w1_packed, w23_packed = pack_params(params, input_dim, hidden_dim,
                                        output_dim)

    out = simplenet_forward(x, w1_packed, w23_packed, output_dim=output_dim)
    out = jax.block_until_ready(out)

    ref = reference_forward(x, params)
    assert out.shape == (batch, output_dim)
    # bf16 MXU path vs f32 reference: tolerance loosened accordingly.
    assert jnp.allclose(out, ref, atol=5e-2, rtol=5e-2)

    print("KERNEL_OK")
</pallas_src>

<mosaic_0001>
module attributes {stable_mosaic.version = 11 : i64} {
  func.func @_simplenet_kernel(%arg0: i32, %arg1: memref<16x8xbf16, #tpu.memory_space<vmem>>, %arg2: memref<8x128xbf16, #tpu.memory_space<vmem>>, %arg3: memref<2x128x128xbf16, #tpu.memory_space<vmem>>, %arg4: memref<16x128xf32, #tpu.memory_space<vmem>>) attributes {dimension_semantics = [#tpu.dimension_semantics<parallel>], iteration_bounds = array<i64: 1>, scalar_prefetch = 0 : i64, scratch_operands = 0 : i64, tpu.core_type = #tpu.core_type<tc>, window_params = [{transform_indices = @transform_0, window_bounds = array<i64: 16, 8>}, {pipeline_mode = #tpu.pipeline_mode<synchronous>, transform_indices = @transform_1, window_bounds = array<i64: 8, 128>}, {pipeline_mode = #tpu.pipeline_mode<synchronous>, transform_indices = @transform_2, window_bounds = array<i64: 2, 128, 128>}, {transform_indices = @transform_3, window_bounds = array<i64: 16, 128>}]} {
    %c0 = arith.constant 0 : index
    %c0_0 = arith.constant 0 : index
    %0 = vector.load %arg1[%c0, %c0_0] : memref<16x8xbf16, #tpu.memory_space<vmem>>, vector<16x8xbf16>
    %c0_1 = arith.constant 0 : index
    %c0_2 = arith.constant 0 : index
    %1 = vector.load %arg2[%c0_1, %c0_2] : memref<8x128xbf16, #tpu.memory_space<vmem>>, vector<8x128xbf16>
    %cst = arith.constant dense<0.000000e+00> : vector<16x128xf32>
    %2 = tpu.matmul %0, %1, %cst {dimension_numbers = #tpu.dot_dimension_numbers<[1], [0], [0], [1], [0, 0, 1, 1], [], []>} : vector<16x8xbf16>, vector<8x128xbf16>, vector<16x128xf32> -> vector<16x128xf32>
    %cst_3 = arith.constant 0.000000e+00 : f32
    %3 = vector.broadcast %cst_3 : f32 to vector<16x128xf32>
    %4 = arith.maximumf %2, %3 : vector<16x128xf32>
    %5 = arith.truncf %4 : vector<16x128xf32> to vector<16x128xbf16>
    %c0_4 = arith.constant 0 : index
    %c0_5 = arith.constant 0 : index
    %c0_6 = arith.constant 0 : index
    %6 = vector.load %arg3[%c0_4, %c0_5, %c0_6] : memref<2x128x128xbf16, #tpu.memory_space<vmem>>, vector<1x128x128xbf16>
    %7 = vector.shape_cast %6 : vector<1x128x128xbf16> to vector<128x128xbf16>
    %cst_7 = arith.constant dense<0.000000e+00> : vector<16x128xf32>
    %8 = tpu.matmul %5, %7, %cst_7 {dimension_numbers = #tpu.dot_dimension_numbers<[1], [0], [0], [1], [0, 0, 1, 1], [], []>} : vector<16x128xbf16>, vector<128x128xbf16>, vector<16x128xf32> -> vector<16x128xf32>
    %cst_8 = arith.constant 0.000000e+00 : f32
    %9 = vector.broadcast %cst_8 : f32 to vector<16x128xf32>
    %10 = arith.maximumf %8, %9 : vector<16x128xf32>
    %11 = arith.truncf %10 : vector<16x128xf32> to vector<16x128xbf16>
    %c1 = arith.constant 1 : index
    %c0_9 = arith.constant 0 : index
    %c0_10 = arith.constant 0 : index
    %12 = vector.load %arg3[%c1, %c0_9, %c0_10] : memref<2x128x128xbf16, #tpu.memory_space<vmem>>, vector<1x128x128xbf16>
    %13 = vector.shape_cast %12 : vector<1x128x128xbf16> to vector<128x128xbf16>
    %cst_11 = arith.constant dense<0.000000e+00> : vector<16x128xf32>
    %14 = tpu.matmul %11, %13, %cst_11 {dimension_numbers = #tpu.dot_dimension_numbers<[1], [0], [0], [1], [0, 0, 1, 1], [], []>} : vector<16x128xbf16>, vector<128x128xbf16>, vector<16x128xf32> -> vector<16x128xf32>
    %c0_12 = arith.constant 0 : index
    %c0_13 = arith.constant 0 : index
    %15 = vector.load %arg4[%c0_12, %c0_13] : memref<16x128xf32, #tpu.memory_space<vmem>>, vector<16x128xf32>
    tpu.vector_store %arg4[%c0_12, %c0_13], %14 {strides = array<i32>} : memref<16x128xf32, #tpu.memory_space<vmem>>, vector<16x128xf32>,
    return
  }
  func.func @transform_0(%arg0: i32) -> (i32, i32) {
    %c0_i32 = arith.constant 0 : i32
    %c0_i32_0 = arith.constant 0 : i32
    return %arg0, %c0_i32 : i32, i32
  }
  func.func @transform_1(%arg0: i32) -> (i32, i32) {
    %c0_i32 = arith.constant 0 : i32
    %c0_i32_0 = arith.constant 0 : i32
    %c0_i32_1 = arith.constant 0 : i32
    return %c0_i32, %c0_i32_0 : i32, i32
  }
  func.func @transform_2(%arg0: i32) -> (i32, i32, i32) {
    %c0_i32 = arith.constant 0 : i32
    %c0_i32_0 = arith.constant 0 : i32
    %c0_i32_1 = arith.constant 0 : i32
    %c0_i32_2 = arith.constant 0 : i32
    return %c0_i32, %c0_i32_0, %c0_i32_1 : i32, i32, i32
  }
  func.func @transform_3(%arg0: i32) -> (i32, i32) {
    %c0_i32 = arith.constant 0 : i32
    %c0_i32_0 = arith.constant 0 : i32
    return %arg0, %c0_i32 : i32, i32
  }
}

</mosaic_0001>

<llo_original>
// kernel: simplenet_forward.1
$region0: #{simplenet_forward.1}
  #allocation0 [shape = 'u32[]', space=smem, size = 0x4, offset = 0x4, fixed_abs, tag = 'smem constant byte address 0x4 - core index']
  #allocation1 [shape = 'u32[72,128]{1,0:T(1,128)}', space=vmem, size = 0x9000, scoped, tag = 'internal scratch']
  %s0 = inlined_call_operand.vmem [shape: bf16[16,8], index: 0, kind: input, shape index: {}]
  %s1 = inlined_call_operand.vmem [shape: bf16[8,128], index: 1, kind: input, shape index: {}]
  %s2 = inlined_call_operand.hbm [shape: bf16[2,128,128], index: 2, kind: input, shape index: {}]
  %s3 = inlined_call_operand.vmem [shape: f32[16,128], index: 3, kind: output, shape index: {}]
  %s4 = sld [smem:[#allocation0]]
  $region26: #{simplenet_forward.1} parent=0
    _
  %s6 = ssub.s32 1, %s4
  %s7 = scalar_select 0, %s6, %s4
  $region1: #{simplenet_forward.1} parent=0
    #allocation2 [shape = 'u8[65536]{0}', space=vmem, size = 0x10000, scoped, tag = 'input window, operand 2, single buffered']
    #allocation3 [shape = 's32[1]{0}', space=sflag, size = 0x4, scoped, tag = 'scoped memory for simplenet_forward.1']
    %8 = vsyncpa [#allocation3], 0
    // Predicated region
    $region2: #{simplenet_forward.1} parent=1 // pred_check
      _
    $region3: #{simplenet_forward.1} parent=1 // pred_check_branch
      %10 = sbr.rel (0) target = $region5
    $region4: #{simplenet_forward.1} parent=1 // pred_region
      _
    $region5: #{simplenet_forward.1} parent=1 // pred_fallthru
      _
    // Predicated region
    $region6: #{simplenet_forward.1} parent=1 // pred_check
      _
    $region7: #{simplenet_forward.1} parent=1 // pred_check_branch
      %12 = sbr.rel (0) target = $region9
    $region8: #{simplenet_forward.1} parent=1 // pred_region
      _
    $region9: #{simplenet_forward.1} parent=1 // pred_fallthru
      _
    // Predicated region
    $region10: #{simplenet_forward.1} parent=1 // pred_check
      _
    $region11: #{simplenet_forward.1} parent=1 // pred_check_branch
      %14 = sbr.rel (0) target = $region13
    $region12: #{simplenet_forward.1} parent=1 // pred_region
      %16 = vsyncadd [#allocation3], 0
      %s17 = sshll.u32 %s2, 4
      %s18 = int_to_ptr.hbm [resolvable:$true] %s17
      %s19 = sshll.u32 [#allocation2], 4
      %s20 = int_to_ptr.vmem [resolvable:$true] %s19
      %25 = dma.hbm_to_vmem [thread:$0]  %s18, 2048, %s20, [#allocation3], 64, 64, 4
    $region13: #{simplenet_forward.1} parent=1 // pred_fallthru
      _
    // Predicated region
    $region14: #{simplenet_forward.1} parent=1 // pred_check
      _
    $region15: #{simplenet_forward.1} parent=1 // pred_check_branch
      %27 = sbr.rel (0) target = $region17
    $region16: #{simplenet_forward.1} parent=1 // pred_region
      %29 = dma.done [#allocation3], 2048
    $region17: #{simplenet_forward.1} parent=1 // pred_fallthru
      _
    %v31 = vld [vmem:[%s0] sm:$0xf]
    %v32 = vld [vmem:[%s0 + $0x4] sm:$0xf]
    %v33 = vld [vmem:[%s1] sm:$0xf]
    %v36 = vunpack.c.l.b16 %v31
    %v37 = vunpack.c.l.b16 %v32
    %v38 = vpack.c.b16 %v37, %v36
    %vm39 = vcmask 64512
    %v41 = vsel %vm39, %v38, 0
    %vm43 = vcmask 1043456
    %v45 = vsel %vm43, %v33, 0
    %47 = vmatpush.bf16.msra.mxu0 0
    %48 = vmatpush.bf16.msra.mxu0 0
    %49 = vmatpush.bf16.msra.mxu0 0
    %50 = vmatpush.bf16.msra.mxu0 0
    %51 = vmatpush.bf16.msra.mxu0 0
    %52 = vmatpush.bf16.msra.mxu0 0
    %53 = vmatpush.bf16.msra.mxu0 0
    %54 = vmatpush.bf16.msra.mxu0 %v45
    %55 = vmatmul.bf16.gmra.mxu0 %v41
    %v56 = vpop.f32.mrf.mxu0
    %v57 = vadd.f32 0.0, %v56
    %v58 = vpop.f32.mrf.mxu0
    %v59 = vadd.f32 0.0, %v58
    %60 = vdwg.mxu0
    %v61 = vmax.f32 %v57, 0.0
    %v62 = vmax.f32 %v59, 0.0
    %v63 = vpack.c.bf16 %v62, %v61
    %v64 = vld [vmem:[#allocation2] sm:$0xf]
    %v65 = vld [vmem:[#allocation2 + $0x4] sm:$0xf]
    %v66 = vld [vmem:[#allocation2 + $0x8] sm:$0xf]
    %v67 = vld [vmem:[#allocation2 + $0xc] sm:$0xf]
    %v68 = vld [vmem:[#allocation2 + $0x10] sm:$0xf]
    %v69 = vld [vmem:[#allocation2 + $0x14] sm:$0xf]
    %v70 = vld [vmem:[#allocation2 + $0x18] sm:$0xf]
    %v71 = vld [vmem:[#allocation2 + $0x1c] sm:$0xf]
    %v72 = vld [vmem:[#allocation2 + $0x20] sm:$0xf]
    %v73 = vld [vmem:[#allocation2 + $0x24] sm:$0xf]
    %v74 = vld [vmem:[#allocation2 + $0x28] sm:$0xf]
    %v75 = vld [vmem:[#allocation2 + $0x2c] sm:$0xf]
    %v76 = vld [vmem:[#allocation2 + $0x30] sm:$0xf]
    %v77 = vld [vmem:[#allocation2 + $0x34] sm:$0xf]
    %v78 = vld [vmem:[#allocation2 + $0x38] sm:$0xf]
    %v79 = vld [vmem:[#allocation2 + $0x3c] sm:$0xf]
    %v96 = vunpack.c.l.b16 %v64
    %v97 = vunpack.c.l.b16 %v65
    %v98 = vunpack.c.l.b16 %v66
    %v99 = vunpack.c.l.b16 %v67
    %v100 = vunpack.c.l.b16 %v68
    %v101 = vunpack.c.l.b16 %v69
    %v102 = vunpack.c.l.b16 %v70
    %v103 = vunpack.c.l.b16 %v71
    %v104 = vunpack.c.l.b16 %v72
    %v105 = vunpack.c.l.b16 %v73
    %v106 = vunpack.c.l.b16 %v74
    %v107 = vunpack.c.l.b16 %v75
    %v108 = vunpack.c.l.b16 %v76
    %v109 = vunpack.c.l.b16 %v77
    %v110 = vunpack.c.l.b16 %v78
    %v111 = vunpack.c.l.b16 %v79
    %v112 = vpack.c.b16 %v97, %v96
    %v113 = vpack.c.b16 %v99, %v98
    %v114 = vpack.c.b16 %v101, %v100
    %v115 = vpack.c.b16 %v103, %v102
    %v116 = vpack.c.b16 %v105, %v104
    %v117 = vpack.c.b16 %v107, %v106
    %v118 = vpack.c.b16 %v109, %v108
    %v119 = vpack.c.b16 %v111, %v110
    %128 = vmatpush.bf16.msra.mxu0 %v119
    %129 = vmatpush.bf16.msra.mxu0 %v118
    %130 = vmatpush.bf16.msra.mxu0 %v117
    %131 = vmatpush.bf16.msra.mxu0 %v116
    %132 = vmatpush.bf16.msra.mxu0 %v115
    %133 = vmatpush.bf16.msra.mxu0 %v114
    %134 = vmatpush.bf16.msra.mxu0 %v113
    %135 = vmatpush.bf16.msra.mxu0 %v112
    %136 = vmatmul.bf16.gmra.mxu0 %v63
    %v137 = vpop.f32.mrf.mxu0
    %v138 = vadd.f32 0.0, %v137
    %v139 = vpop.f32.mrf.mxu0
    %v140 = vadd.f32 0.0, %v139
    %141 = vdwg.mxu0
    %v142 = vmax.f32 %v138, 0.0
    %v143 = vmax.f32 %v140, 0.0
    %v144 = vpack.c.bf16 %v143, %v142
    %s145 = scalar_lea.vmem [#allocation2], 64
    %v146 = vld [vmem:[%s145] sm:$0xf]
    %v147 = vld [vmem:[%s145 + $0x4] sm:$0xf]
    %v148 = vld [vmem:[%s145 + $0x8] sm:$0xf]
    %v149 = vld [vmem:[%s145 + $0xc] sm:$0xf]
    %v150 = vld [vmem:[%s145 + $0x10] sm:$0xf]
    %v151 = vld [vmem:[%s145 + $0x14] sm:$0xf]
    %v152 = vld [vmem:[%s145 + $0x18] sm:$0xf]
    %v153 = vld [vmem:[%s145 + $0x1c] sm:$0xf]
    %v154 = vld [vmem:[%s145 + $0x20] sm:$0xf]
    %v155 = vld [vmem:[%s145 + $0x24] sm:$0xf]
    %v156 = vld [vmem:[%s145 + $0x28] sm:$0xf]
    %v157 = vld [vmem:[%s145 + $0x2c] sm:$0xf]
    %v158 = vld [vmem:[%s145 + $0x30] sm:$0xf]
    %v159 = vld [vmem:[%s145 + $0x34] sm:$0xf]
    %v160 = vld [vmem:[%s145 + $0x38] sm:$0xf]
    %v161 = vld [vmem:[%s145 + $0x3c] sm:$0xf]
    %v178 = vunpack.c.l.b16 %v146
    %v179 = vunpack.c.l.b16 %v147
    %v180 = vunpack.c.l.b16 %v148
    %v181 = vunpack.c.l.b16 %v149
    %v182 = vunpack.c.l.b16 %v150
    %v183 = vunpack.c.l.b16 %v151
    %v184 = vunpack.c.l.b16 %v152
    %v185 = vunpack.c.l.b16 %v153
    %v186 = vunpack.c.l.b16 %v154
    %v187 = vunpack.c.l.b16 %v155
    %v188 = vunpack.c.l.b16 %v156
    %v189 = vunpack.c.l.b16 %v157
    %v190 = vunpack.c.l.b16 %v158
    %v191 = vunpack.c.l.b16 %v159
    %v192 = vunpack.c.l.b16 %v160
    %v193 = vunpack.c.l.b16 %v161
    %v194 = vpack.c.b16 %v179, %v178
    %v195 = vpack.c.b16 %v181, %v180
    %v196 = vpack.c.b16 %v183, %v182
    %v197 = vpack.c.b16 %v185, %v184
    %v198 = vpack.c.b16 %v187, %v186
    %v199 = vpack.c.b16 %v189, %v188
    %v200 = vpack.c.b16 %v191, %v190
    %v201 = vpack.c.b16 %v193, %v192
    %210 = vmatpush.bf16.msra.mxu0 %v201
    %211 = vmatpush.bf16.msra.mxu0 %v200
    %212 = vmatpush.bf16.msra.mxu0 %v199
    %213 = vmatpush.bf16.msra.mxu0 %v198
    %214 = vmatpush.bf16.msra.mxu0 %v197
    %215 = vmatpush.bf16.msra.mxu0 %v196
    %216 = vmatpush.bf16.msra.mxu0 %v195
    %217 = vmatpush.bf16.msra.mxu0 %v194
    %218 = vmatmul.bf16.gmra.mxu0 %v144
    %v219 = vpop.f32.mrf.mxu0
    %v220 = vadd.f32 0.0, %v219
    %v221 = vpop.f32.mrf.mxu0
    %v222 = vadd.f32 0.0, %v221
    %223 = vdwg.mxu0
    %224 = vst [vmem:[%s3] sm:$0xff] %v220
    %225 = vst [vmem:[%s3 + $0x8] sm:$0xff] %v222
    // Predicated region
    $region18: #{simplenet_forward.1} parent=1 // pred_check
      _
    $region19: #{simplenet_forward.1} parent=1 // pred_check_branch
      %227 = sbr.rel (0) target = $region21
    $region20: #{simplenet_forward.1} parent=1 // pred_region
      _
    $region21: #{simplenet_forward.1} parent=1 // pred_fallthru
      _
    // Predicated region
    $region22: #{simplenet_forward.1} parent=1 // pred_check
      _
    $region23: #{simplenet_forward.1} parent=1 // pred_check_branch
      %229 = sbr.rel (0) target = $region25
    $region24: #{simplenet_forward.1} parent=1 // pred_region
      _
    $region25: #{simplenet_forward.1} parent=1 // pred_fallthru
      _
    %230 = vsyncpa [#allocation3], 1

</llo_original>
